<compile_context>
chip_gen: v5e
topology: v5e:2x2
jax: 0.10.0
libtpu: 0.0.40
codegen_flags: <defaults>
</compile_context>

<pallas_src>
import functools

import jax
import jax.numpy as jnp
import numpy as np
from jax.experimental import pallas as pl
from jax.experimental.pallas import tpu as pltpu


def _round_up(n, m):
    return (n + m - 1) // m * m


@functools.lru_cache(maxsize=None)
def _tpu_generation():
    """Best-effort TPU generation (5 for v5e/v5p, 6 for v6e, 7 for v7x, ...)."""
    try:
        kind = jax.devices()[0].device_kind.lower()
    except Exception:
        return 6
    for g in (7, 6, 5, 4):
        if f"v{g}" in kind:
            return g
    return 6


def _choose_block_b(batch, gen):
    # Large batch tiles are the biggest wall-clock lever here: each grid step does
    # only a few hundred cycles of real MXU work, so per-step grid overhead and MXU
    # fill/drain dominate.  Per-block VMEM at block_b=4096 is only a few MiB
    # (x tile 256 KiB f32 double-buffered + (block_b, 64) intermediates), well inside
    # every generation's default scoped-VMEM budget, so no vmem_limit_bytes needed.
    #   * v6e (and default): cap 4096.
    #   * v5e/v4: cap 2048 (f32-only VPU + single store slot -> store traffic grows
    #     faster into the binding slot; 16 MiB default scoped VMEM).
    #   * v7x: additionally cap at round_up(cdiv(B,2),128) so the 'parallel' batch
    #     axis always has >= 2 grid steps and both TensorCores get work.
    cap = 2048 if gen <= 5 else 4096
    if gen >= 7:
        cap = min(cap, max(128, _round_up(pl.cdiv(batch, 2), 128)))
    if batch <= cap:
        return batch   # single grid step; block == full batch (block equals array dims)
    return cap         # multiple of 128 -> unmasked lane-dense output stores


def _mlp_kernel(x_ref, w1_ref, b1_ref, w2_ref, b2_ref, w3_ref, b3_ref,
                w4t_ref, b4_ref, o_ref):
    cdt = w1_ref.dtype   # MXU operand dtype (bf16 by default, f32 optional)
    adt = b1_ref.dtype   # bias-add / ReLU dtype: bf16 on v6e/v7x, f32 on v4/v5
    # x tile arrives as f32 straight from HBM; cast on the VPU (essentially free,
    # avoids a separate host-side astype pass over x).
    x = x_ref[...].astype(cdt)
    # shared layer: 3x (Linear -> ReLU).  MXU accumulates in f32; bias add + ReLU run
    # in `adt` so v6e/v7x carry bf16 intermediates (halves vreg/VMEM ld-st bytes),
    # while v4/v5 keep f32 (no native bf16 VPU there).
    h = jnp.dot(x, w1_ref[...], preferred_element_type=jnp.float32)
    h = jnp.maximum(h.astype(adt) + b1_ref[...], 0.0).astype(cdt)
    h = jnp.dot(h, w2_ref[...], preferred_element_type=jnp.float32)
    h = jnp.maximum(h.astype(adt) + b2_ref[...], 0.0).astype(cdt)
    h = jnp.dot(h, w3_ref[...], preferred_element_type=jnp.float32)
    h = jnp.maximum(h.astype(adt) + b3_ref[...], 0.0).astype(cdt)
    # final layer: Linear (no activation), computed transposed on the MXU:
    # (O, block_b) = w4t(O, H3) . h(block_b, H3)^T  -- same contraction pattern as
    # q @ k.T in flash attention, so no explicit XLU transpose of h is expected.
    # TODO(synk): if an MLIR dump ever shows Mosaic relayouting h for this
    # contraction, switch the last layer to a VPU broadcast-multiply + axis=-1 reduce.
    out_t = jax.lax.dot_general(
        w4t_ref[...], h,
        dimension_numbers=(((1,), (1,)), ((), ())),
        preferred_element_type=jnp.float32) + b4_ref[...]
    o_ref[...] = out_t.astype(o_ref.dtype)


@functools.partial(jax.jit,
                   static_argnames=("block_b", "compute_dtype", "act_dtype"))
def _transnet_forward(x, params, block_b, compute_dtype, act_dtype):
    (w1, b1), (w2, b2), (w3, b3), (w4, b4) = params
    B, F = x.shape
    H1, H2, H3, O = w1.shape[1], w2.shape[1], w3.shape[1], w4.shape[1]

    # No host-side padding and no host-side x cast: the kernel reads f32 tiles and
    # Pallas masks the ragged tail block (see header comment for the invariant).
    num_blocks = pl.cdiv(B, block_b)

    # matmul operands in compute_dtype (bf16 matches the native MXU dtype on
    # v6e/v7x); bias-add/ReLU dtype is act_dtype (bf16 on v6e/v7x, f32 on v4/v5).
    w1c, w2c, w3c = (w.astype(compute_dtype) for w in (w1, w2, w3))
    w4t = w4.T.astype(compute_dtype)                  # (O, H3), torch (out,in) layout
    b1r, b2r, b3r = (b.reshape(1, -1).astype(act_dtype) for b in (b1, b2, b3))
    b4c = b4.reshape(-1, 1).astype(jnp.float32)       # (O, 1) broadcasts over lanes

    # Weights/biases have grid-invariant index maps, so the pipeline keeps them
    # resident and only DMAs them on the first step.  (pipeline_mode=pl.Buffered(1)
    # would also drop their pointless second buffer, but is skipped for
    # compatibility; it is only ~tens of KiB of VMEM at these sizes.)
    def resident(shape):
        return pl.BlockSpec(shape, lambda i, _n=len(shape): (0,) * _n)

    w_itemsize = np.dtype(compute_dtype).itemsize
    a_itemsize = np.dtype(act_dtype).itemsize
    flops = 2 * B * (F * H1 + H1 * H2 + H2 * H3 + H3 * O)
    bytes_accessed = (
        B * F * 4                                              # x (read as f32)
        + (F * H1 + H1 * H2 + H2 * H3 + H3 * O) * w_itemsize   # weights
        + (H1 + H2 + H3) * a_itemsize + O * 4                  # biases
        + B * O * 4)                                           # output
    cost = pl.CostEstimate(flops=flops, transcendentals=0,
                           bytes_accessed=bytes_accessed)

    out_t = pl.pallas_call(
        _mlp_kernel,
        out_shape=jax.ShapeDtypeStruct((O, B), jnp.float32),
        grid_spec=pltpu.PrefetchScalarGridSpec(
            num_scalar_prefetch=0,
            grid=(num_blocks,),
            in_specs=[
                pl.BlockSpec((block_b, F), lambda i: (i, 0)),   # x batch tile (f32)
                resident((F, H1)), resident((1, H1)),
                resident((H1, H2)), resident((1, H2)),
                resident((H2, H3)), resident((1, H3)),
                resident((O, H3)), resident((O, 1)),
            ],
            out_specs=pl.BlockSpec((O, block_b), lambda i: (0, i)),
        ),
        compiler_params=pltpu.CompilerParams(
            dimension_semantics=("parallel",)),
        cost_estimate=cost,
    )(x, w1c, b1r, w2c, b2r, w3c, b3r, w4t, b4c)

    return out_t.T          # (B, O), matching the PyTorch module's output


def _default_act_dtype(compute_dtype, gen):
    cdt = np.dtype(compute_dtype)
    if gen >= 6 and cdt == np.dtype(jnp.bfloat16):
        return cdt           # native bf16 VPU: bias-add/ReLU + intermediates in bf16
    return np.dtype(jnp.float32)


def transnet_forward(x, params, block_b=None, compute_dtype=jnp.bfloat16,
                     act_dtype=None):
    """TransNet forward: x (B, feature_size) f32 -> (B, out_layer) f32."""
    gen = _tpu_generation()
    if block_b is None:
        block_b = _choose_block_b(x.shape[0], gen)
    cdt = np.dtype(compute_dtype)
    adt = np.dtype(act_dtype) if act_dtype is not None else _default_act_dtype(cdt, gen)
    return _transnet_forward(x, params, int(block_b), cdt, adt)


def _init_linear(key, fan_in, fan_out):
    # PyTorch default init: U(-1/sqrt(fan_in), 1/sqrt(fan_in)) for weight and bias.
    kw, kb = jax.random.split(key)
    bound = 1.0 / np.sqrt(fan_in)
    # stored as (in, out) == transpose of torch's (out, in)
    w = jax.random.uniform(kw, (fan_in, fan_out), jnp.float32, -bound, bound)
    b = jax.random.uniform(kb, (fan_out,), jnp.float32, -bound, bound)
    return w, b


def _reference(x, params, compute_dtype=jnp.float32, act_dtype=jnp.float32):
    # Mirrors the kernel: matmul operands cast to compute_dtype (f32 accumulation),
    # bias-add/ReLU in act_dtype.
    (w1, b1), (w2, b2), (w3, b3), (w4, b4) = params
    cdt, adt = compute_dtype, act_dtype
    h = x
    for w, b in ((w1, b1), (w2, b2), (w3, b3)):
        y = jnp.dot(h.astype(cdt), w.astype(cdt), preferred_element_type=jnp.float32)
        h = jnp.maximum(y.astype(adt) + b.astype(adt), 0.0).astype(jnp.float32)
    return jnp.dot(h.astype(cdt), w4.astype(cdt),
                   preferred_element_type=jnp.float32) + b4


if __name__ == "__main__":
    # Shapes consistent with the module: feature_size = number of desc_target
    # columns (not available here; fixed to 16), hidden layers h_layer1/2/3,
    # out_layer = 1.
    feature_size = 16
    h_layer1, h_layer2, h_layer3 = 64, 64, 32
    out_layer = 1

    key = jax.random.PRNGKey(0)
    kx, k1, k2, k3, k4, kx2, kx3 = jax.random.split(key, 7)

    params = (
        _init_linear(k1, feature_size, h_layer1),
        _init_linear(k2, h_layer1, h_layer2),
        _init_linear(k3, h_layer2, h_layer3),
        _init_linear(k4, h_layer3, out_layer),
    )

    gen = _tpu_generation()
    adt_bf16 = _default_act_dtype(jnp.bfloat16, gen)

    # (1) small batch, default bf16 matmul operands (single grid step).
    #     Tolerance is loose only because operands/activations are bf16-quantized.
    x_small = jax.random.normal(kx, (8, feature_size), jnp.float32)
    out_bf16 = jax.block_until_ready(transnet_forward(x_small, params))
    ref_bf16 = _reference(x_small, params, jnp.bfloat16, adt_bf16)
    np.testing.assert_allclose(np.asarray(out_bf16), np.asarray(ref_bf16),
                               rtol=2e-2, atol=2e-2)

    # (2) f32 operands, tight tolerance (validates the fused-MLP numerics).
    out_f32 = jax.block_until_ready(
        transnet_forward(x_small, params, compute_dtype=jnp.float32))
    ref_f32 = _reference(x_small, params, jnp.float32, jnp.float32)
    np.testing.assert_allclose(np.asarray(out_f32), np.asarray(ref_f32),
                               rtol=1e-5, atol=1e-5)

    # (3) odd batch size (not a multiple of 8/128): single full-batch block on
    #     v5e/v6e, 2-step ragged grid on v7x -- no host-side padding in either case.
    x_mid = jax.random.normal(kx2, (300, feature_size), jnp.float32)
    out_mid = jax.block_until_ready(
        transnet_forward(x_mid, params, compute_dtype=jnp.float32))
    ref_mid = _reference(x_mid, params, jnp.float32, jnp.float32)
    np.testing.assert_allclose(np.asarray(out_mid), np.asarray(ref_mid),
                               rtol=1e-5, atol=1e-5)

    # (4) large batch -> multi-block grid with a ragged last block (Pallas tail
    #     masking), large tiles, lane-dense (1, block_b) output stores.
    x_big = jax.random.normal(kx3, (5000, feature_size), jnp.float32)
    out_big = jax.block_until_ready(transnet_forward(x_big, params))
    ref_big = _reference(x_big, params, jnp.bfloat16, adt_bf16)
    np.testing.assert_allclose(np.asarray(out_big), np.asarray(ref_big),
                               rtol=2e-2, atol=2e-2)

    print("KERNEL_OK")
</pallas_src>

<mosaic_0001>
module attributes {stable_mosaic.version = 11 : i64} {
  func.func @_mlp_kernel(%arg0: i32, %arg1: memref<8x16xf32, #tpu.memory_space<vmem>>, %arg2: memref<16x64xbf16, #tpu.memory_space<vmem>>, %arg3: memref<1x64xbf16, #tpu.memory_space<vmem>>, %arg4: memref<64x64xbf16, #tpu.memory_space<vmem>>, %arg5: memref<1x64xbf16, #tpu.memory_space<vmem>>, %arg6: memref<64x32xbf16, #tpu.memory_space<vmem>>, %arg7: memref<1x32xbf16, #tpu.memory_space<vmem>>, %arg8: memref<1x32xbf16, #tpu.memory_space<vmem>>, %arg9: memref<1x1xf32, #tpu.memory_space<vmem>>, %arg10: memref<1x8xf32, #tpu.memory_space<vmem>>) attributes {dimension_semantics = [#tpu.dimension_semantics<parallel>], iteration_bounds = array<i64: 1>, scalar_prefetch = 0 : i64, scratch_operands = 0 : i64, tpu.core_type = #tpu.core_type<tc>, window_params = [{transform_indices = @transform_0, window_bounds = array<i64: 8, 16>}, {pipeline_mode = #tpu.pipeline_mode<synchronous>, transform_indices = @transform_1, window_bounds = array<i64: 16, 64>}, {pipeline_mode = #tpu.pipeline_mode<synchronous>, transform_indices = @transform_2, window_bounds = array<i64: 1, 64>}, {pipeline_mode = #tpu.pipeline_mode<synchronous>, transform_indices = @transform_3, window_bounds = array<i64: 64, 64>}, {pipeline_mode = #tpu.pipeline_mode<synchronous>, transform_indices = @transform_4, window_bounds = array<i64: 1, 64>}, {pipeline_mode = #tpu.pipeline_mode<synchronous>, transform_indices = @transform_5, window_bounds = array<i64: 64, 32>}, {pipeline_mode = #tpu.pipeline_mode<synchronous>, transform_indices = @transform_6, window_bounds = array<i64: 1, 32>}, {pipeline_mode = #tpu.pipeline_mode<synchronous>, transform_indices = @transform_7, window_bounds = array<i64: 1, 32>}, {pipeline_mode = #tpu.pipeline_mode<synchronous>, transform_indices = @transform_8, window_bounds = array<i64: 1, 1>}, {transform_indices = @transform_9, window_bounds = array<i64: 1, 8>}]} {
    %c0 = arith.constant 0 : index
    %c0_0 = arith.constant 0 : index
    %0 = vector.load %arg1[%c0, %c0_0] : memref<8x16xf32, #tpu.memory_space<vmem>>, vector<8x16xf32>
    %1 = arith.truncf %0 : vector<8x16xf32> to vector<8x16xbf16>
    %c0_1 = arith.constant 0 : index
    %c0_2 = arith.constant 0 : index
    %2 = vector.load %arg2[%c0_1, %c0_2] : memref<16x64xbf16, #tpu.memory_space<vmem>>, vector<16x64xbf16>
    %cst = arith.constant dense<0.000000e+00> : vector<8x64xf32>
    %3 = tpu.matmul %1, %2, %cst {dimension_numbers = #tpu.dot_dimension_numbers<[1], [0], [0], [1], [0, 0, 1, 1], [], []>} : vector<8x16xbf16>, vector<16x64xbf16>, vector<8x64xf32> -> vector<8x64xf32>
    %4 = arith.truncf %3 : vector<8x64xf32> to vector<8x64xbf16>
    %c0_3 = arith.constant 0 : index
    %c0_4 = arith.constant 0 : index
    %5 = vector.load %arg3[%c0_3, %c0_4] : memref<1x64xbf16, #tpu.memory_space<vmem>>, vector<1x64xbf16>
    %6 = vector.broadcast %5 : vector<1x64xbf16> to vector<8x64xbf16>
    %7 = arith.addf %4, %6 : vector<8x64xbf16>
    %cst_5 = arith.constant 0.000000e+00 : bf16
    %8 = vector.broadcast %cst_5 : bf16 to vector<8x64xbf16>
    %9 = arith.maximumf %7, %8 : vector<8x64xbf16>
    %c0_6 = arith.constant 0 : index
    %c0_7 = arith.constant 0 : index
    %10 = vector.load %arg4[%c0_6, %c0_7] : memref<64x64xbf16, #tpu.memory_space<vmem>>, vector<64x64xbf16>
    %cst_8 = arith.constant dense<0.000000e+00> : vector<8x64xf32>
    %11 = tpu.matmul %9, %10, %cst_8 {dimension_numbers = #tpu.dot_dimension_numbers<[1], [0], [0], [1], [0, 0, 1, 1], [], []>} : vector<8x64xbf16>, vector<64x64xbf16>, vector<8x64xf32> -> vector<8x64xf32>
    %12 = arith.truncf %11 : vector<8x64xf32> to vector<8x64xbf16>
    %c0_9 = arith.constant 0 : index
    %c0_10 = arith.constant 0 : index
    %13 = vector.load %arg5[%c0_9, %c0_10] : memref<1x64xbf16, #tpu.memory_space<vmem>>, vector<1x64xbf16>
    %14 = vector.broadcast %13 : vector<1x64xbf16> to vector<8x64xbf16>
    %15 = arith.addf %12, %14 : vector<8x64xbf16>
    %cst_11 = arith.constant 0.000000e+00 : bf16
    %16 = vector.broadcast %cst_11 : bf16 to vector<8x64xbf16>
    %17 = arith.maximumf %15, %16 : vector<8x64xbf16>
    %c0_12 = arith.constant 0 : index
    %c0_13 = arith.constant 0 : index
    %18 = vector.load %arg6[%c0_12, %c0_13] : memref<64x32xbf16, #tpu.memory_space<vmem>>, vector<64x32xbf16>
    %cst_14 = arith.constant dense<0.000000e+00> : vector<8x32xf32>
    %19 = tpu.matmul %17, %18, %cst_14 {dimension_numbers = #tpu.dot_dimension_numbers<[1], [0], [0], [1], [0, 0, 1, 1], [], []>} : vector<8x64xbf16>, vector<64x32xbf16>, vector<8x32xf32> -> vector<8x32xf32>
    %20 = arith.truncf %19 : vector<8x32xf32> to vector<8x32xbf16>
    %c0_15 = arith.constant 0 : index
    %c0_16 = arith.constant 0 : index
    %21 = vector.load %arg7[%c0_15, %c0_16] : memref<1x32xbf16, #tpu.memory_space<vmem>>, vector<1x32xbf16>
    %22 = vector.broadcast %21 : vector<1x32xbf16> to vector<8x32xbf16>
    %23 = arith.addf %20, %22 : vector<8x32xbf16>
    %cst_17 = arith.constant 0.000000e+00 : bf16
    %24 = vector.broadcast %cst_17 : bf16 to vector<8x32xbf16>
    %25 = arith.maximumf %23, %24 : vector<8x32xbf16>
    %c0_18 = arith.constant 0 : index
    %c0_19 = arith.constant 0 : index
    %26 = vector.load %arg8[%c0_18, %c0_19] : memref<1x32xbf16, #tpu.memory_space<vmem>>, vector<1x32xbf16>
    %cst_20 = arith.constant dense<0.000000e+00> : vector<1x8xf32>
    %27 = tpu.matmul %26, %25, %cst_20 {dimension_numbers = #tpu.dot_dimension_numbers<[1], [1], [0], [0], [0, 0, 1, 0], [], []>} : vector<1x32xbf16>, vector<8x32xbf16>, vector<1x8xf32> -> vector<1x8xf32>
    %c0_21 = arith.constant 0 : index
    %c0_22 = arith.constant 0 : index
    %28 = vector.load %arg9[%c0_21, %c0_22] : memref<1x1xf32, #tpu.memory_space<vmem>>, vector<1x1xf32>
    %29 = vector.broadcast %28 : vector<1x1xf32> to vector<1x8xf32>
    %30 = arith.addf %27, %29 : vector<1x8xf32>
    %c0_23 = arith.constant 0 : index
    %c0_24 = arith.constant 0 : index
    %31 = vector.load %arg10[%c0_23, %c0_24] : memref<1x8xf32, #tpu.memory_space<vmem>>, vector<1x8xf32>
    tpu.vector_store %arg10[%c0_23, %c0_24], %30 {strides = array<i32>} : memref<1x8xf32, #tpu.memory_space<vmem>>, vector<1x8xf32>,
    return
  }
  func.func @transform_0(%arg0: i32) -> (i32, i32) {
    %c0_i32 = arith.constant 0 : i32
    %c0_i32_0 = arith.constant 0 : i32
    return %arg0, %c0_i32 : i32, i32
  }
  func.func @transform_1(%arg0: i32) -> (i32, i32) {
    %c0_i32 = arith.constant 0 : i32
    %c0_i32_0 = arith.constant 0 : i32
    %c0_i32_1 = arith.constant 0 : i32
    return %c0_i32, %c0_i32_0 : i32, i32
  }
  func.func @transform_2(%arg0: i32) -> (i32, i32) {
    %c0_i32 = arith.constant 0 : i32
    %c0_i32_0 = arith.constant 0 : i32
    %c0_i32_1 = arith.constant 0 : i32
    return %c0_i32, %c0_i32_0 : i32, i32
  }
  func.func @transform_3(%arg0: i32) -> (i32, i32) {
    %c0_i32 = arith.constant 0 : i32
    %c0_i32_0 = arith.constant 0 : i32
    %c0_i32_1 = arith.constant 0 : i32
    return %c0_i32, %c0_i32_0 : i32, i32
  }
  func.func @transform_4(%arg0: i32) -> (i32, i32) {
    %c0_i32 = arith.constant 0 : i32
    %c0_i32_0 = arith.constant 0 : i32
    %c0_i32_1 = arith.constant 0 : i32
    return %c0_i32, %c0_i32_0 : i32, i32
  }
  func.func @transform_5(%arg0: i32) -> (i32, i32) {
    %c0_i32 = arith.constant 0 : i32
    %c0_i32_0 = arith.constant 0 : i32
    %c0_i32_1 = arith.constant 0 : i32
    return %c0_i32, %c0_i32_0 : i32, i32
  }
  func.func @transform_6(%arg0: i32) -> (i32, i32) {
    %c0_i32 = arith.constant 0 : i32
    %c0_i32_0 = arith.constant 0 : i32
    %c0_i32_1 = arith.constant 0 : i32
    return %c0_i32, %c0_i32_0 : i32, i32
  }
  func.func @transform_7(%arg0: i32) -> (i32, i32) {
    %c0_i32 = arith.constant 0 : i32
    %c0_i32_0 = arith.constant 0 : i32
    %c0_i32_1 = arith.constant 0 : i32
    return %c0_i32, %c0_i32_0 : i32, i32
  }
  func.func @transform_8(%arg0: i32) -> (i32, i32) {
    %c0_i32 = arith.constant 0 : i32
    %c0_i32_0 = arith.constant 0 : i32
    %c0_i32_1 = arith.constant 0 : i32
    return %c0_i32, %c0_i32_0 : i32, i32
  }
  func.func @transform_9(%arg0: i32) -> (i32, i32) {
    %c0_i32 = arith.constant 0 : i32
    %c0_i32_0 = arith.constant 0 : i32
    return %c0_i32, %arg0 : i32, i32
  }
}

</mosaic_0001>

<llo_original>
// kernel: _transnet_forward.1
$region0: #{_transnet_forward.1}
  #allocation0 [shape = 'u32[]', space=smem, size = 0x4, offset = 0x4, fixed_abs, tag = 'smem constant byte address 0x4 - core index']
  #allocation1 [shape = 'u32[72,128]{1,0:T(1,128)}', space=vmem, size = 0x9000, scoped, tag = 'internal scratch']
  #allocation2 [shape = 'f32[1,1]{1,0:T(1,128)S(1)}', space=vmem, size = 0x200, scoped, tag = 'scoped memory for _transnet_forward.1']
  %s0 = inlined_call_operand.vmem [shape: f32[8,16], index: 0, kind: input, shape index: {}]
  %s1 = inlined_call_operand.vmem [shape: bf16[16,64], index: 1, kind: input, shape index: {}]
  %s2 = inlined_call_operand.vmem [shape: bf16[1,64], index: 2, kind: input, shape index: {}]
  %s3 = inlined_call_operand.vmem [shape: bf16[64,64], index: 3, kind: input, shape index: {}]
  %s4 = inlined_call_operand.vmem [shape: bf16[1,64], index: 4, kind: input, shape index: {}]
  %s5 = inlined_call_operand.vmem [shape: bf16[64,32], index: 5, kind: input, shape index: {}]
  %s6 = inlined_call_operand.vmem [shape: bf16[1,32], index: 6, kind: input, shape index: {}]
  %s7 = inlined_call_operand.vmem [shape: bf16[1,32], index: 7, kind: input, shape index: {}]
  %s8 = inlined_call_operand.<no memory space> [shape: f32[1,1], index: 8, kind: input, shape index: {}]
  %s9 = inlined_call_operand.hbm [shape: f32[1,8], index: 9, kind: output, shape index: {}]
  %s10 = sld [smem:[#allocation0]]
  $region46: #{_transnet_forward.1} parent=0
    _
  %s12 = ssub.s32 1, %s10
  %s13 = scalar_select 0, %s12, %s10
  %v14 = vstv %s8
  %15 = vst [vmem:[#allocation2] sm:$0x1] %v14
  $region1: #{_transnet_forward.1} parent=0
    #allocation3 [shape = 'u8[512]{0}', space=vmem, size = 0x400, scoped, tag = 'output window, operand 0, single buffered']
    #allocation4 [shape = 's32[1]{0}', space=sflag, size = 0x4, scoped, tag = 'scoped memory for _transnet_forward.1']
    %16 = vsyncpa [#allocation4], 0
    // Predicated region
    $region2: #{_transnet_forward.1} parent=1 // pred_check
      _
    $region3: #{_transnet_forward.1} parent=1 // pred_check_branch
      %18 = sbr.rel (0) target = $region5
    $region4: #{_transnet_forward.1} parent=1 // pred_region
      _
    $region5: #{_transnet_forward.1} parent=1 // pred_fallthru
      _
    // Predicated region
    $region6: #{_transnet_forward.1} parent=1 // pred_check
      _
    $region7: #{_transnet_forward.1} parent=1 // pred_check_branch
      %20 = sbr.rel (0) target = $region9
    $region8: #{_transnet_forward.1} parent=1 // pred_region
      _
    $region9: #{_transnet_forward.1} parent=1 // pred_fallthru
      _
    // Predicated region
    $region10: #{_transnet_forward.1} parent=1 // pred_check
      _
    $region11: #{_transnet_forward.1} parent=1 // pred_check_branch
      %22 = sbr.rel (0) target = $region13
    $region12: #{_transnet_forward.1} parent=1 // pred_region
      _
    $region13: #{_transnet_forward.1} parent=1 // pred_fallthru
      _
    // Predicated region
    $region14: #{_transnet_forward.1} parent=1 // pred_check
      _
    $region15: #{_transnet_forward.1} parent=1 // pred_check_branch
      %24 = sbr.rel (0) target = $region17
    $region16: #{_transnet_forward.1} parent=1 // pred_region
      _
    $region17: #{_transnet_forward.1} parent=1 // pred_fallthru
      _
    // Predicated region
    $region18: #{_transnet_forward.1} parent=1 // pred_check
      _
    $region19: #{_transnet_forward.1} parent=1 // pred_check_branch
      %26 = sbr.rel (0) target = $region21
    $region20: #{_transnet_forward.1} parent=1 // pred_region
      _
    $region21: #{_transnet_forward.1} parent=1 // pred_fallthru
      _
    // Predicated region
    $region22: #{_transnet_forward.1} parent=1 // pred_check
      _
    $region23: #{_transnet_forward.1} parent=1 // pred_check_branch
      %28 = sbr.rel (0) target = $region25
    $region24: #{_transnet_forward.1} parent=1 // pred_region
      _
    $region25: #{_transnet_forward.1} parent=1 // pred_fallthru
      _
    // Predicated region
    $region26: #{_transnet_forward.1} parent=1 // pred_check
      _
    $region27: #{_transnet_forward.1} parent=1 // pred_check_branch
      %30 = sbr.rel (0) target = $region29
    $region28: #{_transnet_forward.1} parent=1 // pred_region
      _
    $region29: #{_transnet_forward.1} parent=1 // pred_fallthru
      _
    // Predicated region
    $region30: #{_transnet_forward.1} parent=1 // pred_check
      _
    $region31: #{_transnet_forward.1} parent=1 // pred_check_branch
      %32 = sbr.rel (0) target = $region33
    $region32: #{_transnet_forward.1} parent=1 // pred_region
      _
    $region33: #{_transnet_forward.1} parent=1 // pred_fallthru
      _
    // Predicated region
    $region34: #{_transnet_forward.1} parent=1 // pred_check
      _
    $region35: #{_transnet_forward.1} parent=1 // pred_check_branch
      %34 = sbr.rel (0) target = $region37
    $region36: #{_transnet_forward.1} parent=1 // pred_region
      _
    $region37: #{_transnet_forward.1} parent=1 // pred_fallthru
      _
    %v36 = vld [vmem:[%s0] sm:$0xff]
    %v37 = vpack.c.bf16 %v36, %v36
    %v38 = vld [vmem:[%s1] sm:$0xf]
    %v39 = vld [vmem:[%s1 + $0x4] sm:$0xf]
    %v42 = vunpack.c.l.b16 %v38
    %v43 = vunpack.c.l.b16 %v39
    %v44 = vpack.c.b16 %v43, %v42
    %vm46 = vcmask 130048
    %v48 = vsel %vm46, %v37, 0
    %50 = vmatpush.bf16.msra.mxu0 0
    %51 = vmatpush.bf16.msra.mxu0 0
    %52 = vmatpush.bf16.msra.mxu0 0
    %53 = vmatpush.bf16.msra.mxu0 0
    %54 = vmatpush.bf16.msra.mxu0 0
    %55 = vmatpush.bf16.msra.mxu0 0
    %56 = vmatpush.bf16.msra.mxu0 0
    %57 = vmatpush.bf16.msra.mxu0 %v44
    %58 = vmatmul.bf16.gmra.mxu0 %v48
    %v59 = vpop.f32.mrf.mxu0
    %v60 = vadd.f32 0.0, %v59
    %v61 = vpop.f32.mrf.mxu0
    %62 = vdwg.mxu0
    %v63 = vpack.c.bf16 %v60, %v60
    %v64 = vld [vmem:[%s2] sm:$0x1]
    %v66 = vpack.i.b16 %v64, %v64
    %v68 = vperm.slane %v66, 0
    %v69 = vunpack.c.l.bf16 %v63
    %v70 = vunpack.c.l.bf16 %v68
    %v71 = vadd.f32 %v69, %v70
    %v72 = vpack.c.bf16 %v71, %v71
    %v73 = vunpack.c.l.bf16 %v72
    %v74 = vmax.f32 %v73, 0.0
    %v75 = vpack.c.bf16 %v74, %v74
    %v76 = vld [vmem:[%s3] sm:$0xf]
    %v77 = vld [vmem:[%s3 + $0x4] sm:$0xf]
    %v78 = vld [vmem:[%s3 + $0x8] sm:$0xf]
    %v79 = vld [vmem:[%s3 + $0xc] sm:$0xf]
    %v80 = vld [vmem:[%s3 + $0x10] sm:$0xf]
    %v81 = vld [vmem:[%s3 + $0x14] sm:$0xf]
    %v82 = vld [vmem:[%s3 + $0x18] sm:$0xf]
    %v83 = vld [vmem:[%s3 + $0x1c] sm:$0xf]
    %v92 = vunpack.c.l.b16 %v76
    %v93 = vunpack.c.l.b16 %v77
    %v94 = vunpack.c.l.b16 %v78
    %v95 = vunpack.c.l.b16 %v79
    %v96 = vunpack.c.l.b16 %v80
    %v97 = vunpack.c.l.b16 %v81
    %v98 = vunpack.c.l.b16 %v82
    %v99 = vunpack.c.l.b16 %v83
    %v100 = vpack.c.b16 %v93, %v92
    %v101 = vpack.c.b16 %v95, %v94
    %v102 = vpack.c.b16 %v97, %v96
    %v103 = vpack.c.b16 %v99, %v98
    %vm108 = vcmask 523264
    %v110 = vsel %vm108, %v75, 0
    %112 = vmatpush.bf16.msra.mxu0 0
    %113 = vmatpush.bf16.msra.mxu0 0
    %114 = vmatpush.bf16.msra.mxu0 0
    %115 = vmatpush.bf16.msra.mxu0 0
    %116 = vmatpush.bf16.msra.mxu0 %v103
    %117 = vmatpush.bf16.msra.mxu0 %v102
    %118 = vmatpush.bf16.msra.mxu0 %v101
    %119 = vmatpush.bf16.msra.mxu0 %v100
    %120 = vmatmul.bf16.gmra.mxu0 %v110
    %v121 = vpop.f32.mrf.mxu0
    %v122 = vadd.f32 0.0, %v121
    %v123 = vpop.f32.mrf.mxu0
    %124 = vdwg.mxu0
    %v125 = vpack.c.bf16 %v122, %v122
    %v126 = vld [vmem:[%s4] sm:$0x1]
    %v128 = vpack.i.b16 %v126, %v126
    %v130 = vperm.slane %v128, 0
    %v131 = vunpack.c.l.bf16 %v125
    %v132 = vunpack.c.l.bf16 %v130
    %v133 = vadd.f32 %v131, %v132
    %v134 = vpack.c.bf16 %v133, %v133
    %v135 = vunpack.c.l.bf16 %v134
    %v136 = vmax.f32 %v135, 0.0
    %v137 = vpack.c.bf16 %v136, %v136
    %v138 = vld [vmem:[%s5] sm:$0xf]
    %v139 = vld [vmem:[%s5 + $0x4] sm:$0xf]
    %v140 = vld [vmem:[%s5 + $0x8] sm:$0xf]
    %v141 = vld [vmem:[%s5 + $0xc] sm:$0xf]
    %v142 = vld [vmem:[%s5 + $0x10] sm:$0xf]
    %v143 = vld [vmem:[%s5 + $0x14] sm:$0xf]
    %v144 = vld [vmem:[%s5 + $0x18] sm:$0xf]
    %v145 = vld [vmem:[%s5 + $0x1c] sm:$0xf]
    %v154 = vunpack.c.l.b16 %v138
    %v155 = vunpack.c.l.b16 %v139
    %v156 = vunpack.c.l.b16 %v140
    %v157 = vunpack.c.l.b16 %v141
    %v158 = vunpack.c.l.b16 %v142
    %v159 = vunpack.c.l.b16 %v143
    %v160 = vunpack.c.l.b16 %v144
    %v161 = vunpack.c.l.b16 %v145
    %v162 = vpack.c.b16 %v155, %v154
    %v163 = vpack.c.b16 %v157, %v156
    %v164 = vpack.c.b16 %v159, %v158
    %v165 = vpack.c.b16 %v161, %v160
    %v171 = vsel %vm108, %v137, 0
    %173 = vmatpush.bf16.msra.mxu0 0
    %174 = vmatpush.bf16.msra.mxu0 0
    %175 = vmatpush.bf16.msra.mxu0 0
    %176 = vmatpush.bf16.msra.mxu0 0
    %177 = vmatpush.bf16.msra.mxu0 %v165
    %178 = vmatpush.bf16.msra.mxu0 %v164
    %179 = vmatpush.bf16.msra.mxu0 %v163
    %180 = vmatpush.bf16.msra.mxu0 %v162
    %181 = vmatmul.bf16.gmra.mxu0 %v171
    %v182 = vpop.f32.mrf.mxu0
    %v183 = vadd.f32 0.0, %v182
    %v184 = vpop.f32.mrf.mxu0
    %185 = vdwg.mxu0
    %v186 = vpack.c.bf16 %v183, %v183
    %v187 = vld [vmem:[%s6] sm:$0x1]
    %v189 = vpack.i.b16 %v187, %v187
    %v191 = vperm.slane %v189, 0
    %v192 = vunpack.c.l.bf16 %v186
    %v193 = vunpack.c.l.bf16 %v191
    %v194 = vadd.f32 %v192, %v193
    %v195 = vpack.c.bf16 %v194, %v194
    %v196 = vunpack.c.l.bf16 %v195
    %v197 = vmax.f32 %v196, 0.0
    %v198 = vpack.c.bf16 %v197, %v197
    %v199 = vld [vmem:[%s7] sm:$0x1]
    %v200 = vld [vmem:[#allocation2] sm:$0x1]
    %202 = vset.pattern.permute.xlu0 0
    %203 = vperm.xlu0 %202, %v200
    %v204 = vpop.permute.xlu0 %203
    %v206 = vperm.slane %v204, 0
    %vm207 = vcmask 261120
    %v209 = vsel %vm207, %v199, 0
    %v212 = vsel %vm207, %v198, 0
    %214 = vmatpush.bf16.xpose.msra.mxu0 0
    %215 = vmatpush.bf16.xpose.msra.mxu0 0
    %216 = vmatpush.bf16.xpose.msra.mxu0 0
    %217 = vmatpush.bf16.xpose.msra.mxu0 0
    %218 = vmatpush.bf16.xpose.msra.mxu0 0
    %219 = vmatpush.bf16.xpose.msra.mxu0 0
    %220 = vmatpush.bf16.xpose.msra.mxu0 0
    %221 = vmatpush.bf16.xpose.msra.mxu0 %v212
    %222 = vmatmul.bf16.gmra.mxu0 %v209
    %v223 = vpop.f32.mrf.mxu0
    %v224 = vadd.f32 %v206, %v223
    %v225 = vpop.f32.mrf.mxu0
    %226 = vdwg.mxu0
    %vm227 = vcmask 57344
    %228 = vst.msk [vmem:[#allocation3] sm:$0x1] %vm227, %v224
    // Predicated region
    $region38: #{_transnet_forward.1} parent=1 // pred_check
      _
    $region39: #{_transnet_forward.1} parent=1 // pred_check_branch
      %230 = sbr.rel (0) target = $region41
    $region40: #{_transnet_forward.1} parent=1 // pred_region
      %232 = vsyncadd [#allocation4], 0
      %s234 = sshll.u32 [#allocation3], 4
      %s235 = int_to_ptr.vmem [resolvable:$true] %s234
      %s236 = sshll.u32 %s9, 4
      %s237 = int_to_ptr.hbm [resolvable:$true] %s236
      %239 = dma.vmem_to_hbm [thread:$0]  %s235, 16, %s237, [#allocation4]
    $region41: #{_transnet_forward.1} parent=1 // pred_fallthru
      _
    // Predicated region
    $region42: #{_transnet_forward.1} parent=1 // pred_check
      _
    $region43: #{_transnet_forward.1} parent=1 // pred_check_branch
      %241 = sbr.rel (0) target = $region45
    $region44: #{_transnet_forward.1} parent=1 // pred_region
      %243 = dma.done [#allocation4], 16
    $region45: #{_transnet_forward.1} parent=1 // pred_fallthru
      _
    %244 = vsyncpa [#allocation4], 1

</llo_original>
